<compile_context>
chip_gen: v6e
topology: v6e:2x2x1
jax: 0.10.0
libtpu: 0.0.40
codegen_flags: <defaults>
</compile_context>

<pallas_src>
import functools

import jax
import jax.numpy as jnp
from jax import lax
from jax.experimental import pallas as pl
from jax.experimental.pallas import tpu as pltpu


def _self_attn_kernel(x_ref, wqkv_ref, bqkv_ref, wo_ref, bo_ref, out_ref, *,
                      num_heads, head_dim, seq_len, batch_block):
    H, D, S, Bb = num_heads, head_dim, seq_len, batch_block
    HD = H * D

    x = x_ref[...]                                         # (Bb*S, C_in) bf16

    # Fused Q/K/V projection: one MXU matmul, f32 accumulation, f32 bias add.
    qkv = jnp.dot(x, wqkv_ref[...],
                  preferred_element_type=jnp.float32) + bqkv_ref[...]
    qkv = qkv.astype(jnp.bfloat16)                         # (Bb*S, HD + 2*D)

    # Multi-query attention: K/V shared across heads.  Scale and the head
    # de-interleave permutation were folded into Wq at trace time.
    per_batch = []
    for b in range(Bb):                                    # static loop
        r0 = b * S
        q_b = qkv[r0:r0 + S, :HD]                          # (S, HD)
        k_b = qkv[r0:r0 + S, HD:HD + D]                    # (S, D)
        v_b = qkv[r0:r0 + S, HD + D:HD + 2 * D]            # (S, D)

        head_outs = []
        for h in range(H):                                 # static loop
            q_h = q_b[:, h * D:(h + 1) * D]                # (S, D)
            # scores = (q / sqrt(D)) @ k^T : contract the last dims.
            scores = lax.dot_general(
                q_h, k_b, (((1,), (1,)), ((), ())),
                preferred_element_type=jnp.float32)        # (S, S) f32
            scores = scores - jnp.max(scores, axis=-1, keepdims=True)
            p = jnp.exp(scores)
            denom = jnp.sum(p, axis=-1, keepdims=True)
            p = p * pl.reciprocal(denom, approx=True)      # EUP vrcp slot
            o_h = jnp.dot(p.astype(jnp.bfloat16), v_b,
                          preferred_element_type=jnp.float32)   # (S, D)
            head_outs.append(o_h)
        per_batch.append(jnp.concatenate(head_outs, axis=1))    # (S, HD)

    h_all = per_batch[0] if Bb == 1 else jnp.concatenate(per_batch, axis=0)

    # Output projection over all Bb*S rows at once.  Wo is padded to a
    # multiple of 128 output columns -> unmasked, lane-dense stores.
    out = jnp.dot(h_all.astype(jnp.bfloat16), wo_ref[...],
                  preferred_element_type=jnp.float32) + bo_ref[...]
    out_ref[...] = out.astype(out_ref.dtype)


def baseline_self_attention(x, params, *, num_heads, hidden_channels):
    """x: (B, S, C_in) float32 -> (B, S, C_out). Multi-query self-attention."""
    B, S, C_in = x.shape
    wq, bq, wk, bk, wv, bv, wo, bo = params
    H, D = num_heads, hidden_channels
    HD = H * D
    C_out = wo.shape[1]

    # ---- trace-time weight preparation (constant-folded by XLA) -----------
    # einops '(hidden num_heads)' => flat q channel index is d*H + h; permute
    # Wq columns so the kernel's q is head-major (h*D + d) and fold the
    # 1/sqrt(D) attention scale into Wq / bq.
    idx = jnp.arange(HD)
    perm = (idx % D) * H + (idx // D)
    scale = 1.0 / jnp.sqrt(jnp.float32(D))
    wq_p = wq[:, perm] * scale
    bq_p = bq[perm] * scale

    w_qkv = jnp.concatenate([wq_p, wk, wv], axis=1)        # (C_in, HD + 2D)
    b_qkv = jnp.concatenate([bq_p, bk, bv], axis=0)        # (HD + 2D,)

    # Pad the output projection to a lane-dense width (multiple of 128).
    C_pad = ((C_out + 127) // 128) * 128
    wo_p = jnp.pad(wo, ((0, 0), (0, C_pad - C_out)))
    bo_p = jnp.pad(bo, ((0, C_pad - C_out),))

    # bf16 matmul operands; biases stay f32 (added after f32 accumulation).
    x2 = x.astype(jnp.bfloat16).reshape(B * S, C_in)
    w_qkv = w_qkv.astype(jnp.bfloat16)
    wo_p = wo_p.astype(jnp.bfloat16)
    b_qkv = b_qkv.reshape(1, -1).astype(jnp.float32)
    bo_p = bo_p.reshape(1, -1).astype(jnp.float32)

    # ---- grid: batch blocks ------------------------------------------------
    # Two "parallel" steps when possible so both v7x TensorCores get work;
    # projections inside a step cover all Bb*S rows at once.
    nb = 2 if (B >= 2 and B % 2 == 0) else 1
    Bb = B // nb

    kernel = functools.partial(
        _self_attn_kernel, num_heads=H, head_dim=D, seq_len=S, batch_block=Bb)

    qkv_cols = HD + 2 * D
    flops = 2 * B * S * (C_in * qkv_cols + 2 * H * S * D + HD * C_pad)
    bytes_accessed = (B * S * C_in * 2 + C_in * qkv_cols * 2 + qkv_cols * 4
                      + HD * C_pad * 2 + C_pad * 4 + B * S * C_pad * 4)
    cost = pl.CostEstimate(flops=flops, transcendentals=B * H * S * S,
                           bytes_accessed=bytes_accessed)

    const = lambda shape: pl.BlockSpec(shape, lambda i: (0,) * len(shape))

    out = pl.pallas_call(
        kernel,
        out_shape=jax.ShapeDtypeStruct((B * S, C_pad), x.dtype),
        grid_spec=pltpu.PrefetchScalarGridSpec(
            num_scalar_prefetch=0,
            grid=(nb,),
            in_specs=[
                pl.BlockSpec((Bb * S, C_in), lambda i: (i, 0)),  # x rows
                const(w_qkv.shape), const(b_qkv.shape),          # fused QKV
                const(wo_p.shape), const(bo_p.shape),            # out proj
            ],
            out_specs=pl.BlockSpec((Bb * S, C_pad), lambda i: (i, 0)),
        ),
        compiler_params=pltpu.CompilerParams(
            dimension_semantics=("parallel",)),
        cost_estimate=cost,
    )(x2, w_qkv, b_qkv, wo_p, bo_p)

    return out.reshape(B, S, C_pad)[:, :, :C_out]


def _reference(x, params, *, num_heads, hidden_channels):
    """Pure-JAX f32 reference mirroring the PyTorch module semantics."""
    wq, bq, wk, bk, wv, bv, wo, bo = params
    B, S, _ = x.shape
    H, D = num_heads, hidden_channels
    q = x @ wq + bq                                       # (B, S, H*D)
    k = x @ wk + bk                                       # (B, S, D)
    v = x @ wv + bv                                       # (B, S, D)
    qh = q.reshape(B, S, D, H).transpose(0, 3, 1, 2)      # (B, H, S, D)
    scale = 1.0 / jnp.sqrt(jnp.float32(D))
    scores = jnp.einsum('bhqd,bkd->bhqk', qh, k) * scale
    p = jax.nn.softmax(scores, axis=-1)
    o = jnp.einsum('bhqk,bkd->bhqd', p, v)                # (B, H, S, D)
    h = o.transpose(0, 2, 1, 3).reshape(B, S, H * D)
    return h @ wo + bo


if __name__ == "__main__":
    B, S = 2, 16
    in_channels, out_channels = 32, 32
    hidden_channels, num_heads = 16, 4

    key = jax.random.PRNGKey(0)
    keys = jax.random.split(key, 5)
    HD = hidden_channels * num_heads

    def init_linear(kw, fan_in, fan_out):
        bound = 1.0 / jnp.sqrt(jnp.float32(fan_in))
        w = jax.random.uniform(kw, (fan_in, fan_out), jnp.float32, -bound, bound)
        b = jax.random.uniform(jax.random.fold_in(kw, 1), (fan_out,),
                               jnp.float32, -bound, bound)
        return w, b

    wq, bq = init_linear(keys[0], in_channels, HD)               # q_linear
    wk, bk = init_linear(keys[1], in_channels, hidden_channels)  # k_linear
    wv, bv = init_linear(keys[2], in_channels, hidden_channels)  # v_linear
    wo, bo = init_linear(keys[3], HD, out_channels)              # out_linear
    params = (wq, bq, wk, bk, wv, bv, wo, bo)

    x = jax.random.normal(keys[4], (B, S, in_channels), jnp.float32)

    out = baseline_self_attention(x, params, num_heads=num_heads,
                                  hidden_channels=hidden_channels)
    out = jax.block_until_ready(out)

    ref = _reference(x, params, num_heads=num_heads,
                     hidden_channels=hidden_channels)
    assert out.shape == (B, S, out_channels)
    # bf16 matmul operands + approx reciprocal -> relaxed tolerance vs f32 ref.
    assert jnp.allclose(out, ref, atol=2e-2, rtol=2e-2), "mismatch vs reference"

    print("KERNEL_OK")
</pallas_src>

<mosaic_0001>
module attributes {stable_mosaic.version = 11 : i64} {
  func.func @_self_attn_kernel(%arg0: i32, %arg1: memref<16x32xbf16, #tpu.memory_space<vmem>>, %arg2: memref<32x96xbf16, #tpu.memory_space<vmem>>, %arg3: memref<1x96xf32, #tpu.memory_space<vmem>>, %arg4: memref<64x128xbf16, #tpu.memory_space<vmem>>, %arg5: memref<1x128xf32, #tpu.memory_space<vmem>>, %arg6: memref<16x128xf32, #tpu.memory_space<vmem>>) attributes {dimension_semantics = [#tpu.dimension_semantics<parallel>], iteration_bounds = array<i64: 2>, scalar_prefetch = 0 : i64, scratch_operands = 0 : i64, tpu.core_type = #tpu.core_type<tc>, window_params = [{transform_indices = @transform_0, window_bounds = array<i64: 16, 32>}, {pipeline_mode = #tpu.pipeline_mode<synchronous>, transform_indices = @transform_1, window_bounds = array<i64: 32, 96>}, {pipeline_mode = #tpu.pipeline_mode<synchronous>, transform_indices = @transform_2, window_bounds = array<i64: 1, 96>}, {pipeline_mode = #tpu.pipeline_mode<synchronous>, transform_indices = @transform_3, window_bounds = array<i64: 64, 128>}, {pipeline_mode = #tpu.pipeline_mode<synchronous>, transform_indices = @transform_4, window_bounds = array<i64: 1, 128>}, {transform_indices = @transform_5, window_bounds = array<i64: 16, 128>}]} {
    %c0 = arith.constant 0 : index
    %c0_0 = arith.constant 0 : index
    %0 = vector.load %arg1[%c0, %c0_0] : memref<16x32xbf16, #tpu.memory_space<vmem>>, vector<16x32xbf16>
    %c0_1 = arith.constant 0 : index
    %c0_2 = arith.constant 0 : index
    %1 = vector.load %arg2[%c0_1, %c0_2] : memref<32x96xbf16, #tpu.memory_space<vmem>>, vector<32x96xbf16>
    %cst = arith.constant dense<0.000000e+00> : vector<16x96xf32>
    %2 = tpu.matmul %0, %1, %cst {dimension_numbers = #tpu.dot_dimension_numbers<[1], [0], [0], [1], [0, 0, 1, 1], [], []>} : vector<16x32xbf16>, vector<32x96xbf16>, vector<16x96xf32> -> vector<16x96xf32>
    %c0_3 = arith.constant 0 : index
    %c0_4 = arith.constant 0 : index
    %3 = vector.load %arg3[%c0_3, %c0_4] : memref<1x96xf32, #tpu.memory_space<vmem>>, vector<1x96xf32>
    %4 = vector.broadcast %3 : vector<1x96xf32> to vector<16x96xf32>
    %5 = arith.addf %2, %4 : vector<16x96xf32>
    %6 = arith.truncf %5 : vector<16x96xf32> to vector<16x96xbf16>
    %7 = vector.extract_strided_slice %6 {offsets = [0, 0], sizes = [16, 64], strides = [1, 1]} : vector<16x96xbf16> to vector<16x64xbf16>
    %8 = vector.extract_strided_slice %6 {offsets = [0, 64], sizes = [16, 16], strides = [1, 1]} : vector<16x96xbf16> to vector<16x16xbf16>
    %9 = vector.extract_strided_slice %6 {offsets = [0, 80], sizes = [16, 16], strides = [1, 1]} : vector<16x96xbf16> to vector<16x16xbf16>
    %10 = vector.extract_strided_slice %7 {offsets = [0, 0], sizes = [16, 16], strides = [1, 1]} : vector<16x64xbf16> to vector<16x16xbf16>
    %cst_5 = arith.constant dense<0.000000e+00> : vector<16x16xf32>
    %11 = tpu.matmul %10, %8, %cst_5 {dimension_numbers = #tpu.dot_dimension_numbers<[1], [1], [0], [0], [0, 0, 1, 0], [], []>} : vector<16x16xbf16>, vector<16x16xbf16>, vector<16x16xf32> -> vector<16x16xf32>
    %cst_6 = arith.constant dense<0xFF800000> : vector<16xf32>
    %12 = vector.multi_reduction <maximumf>, %11, %cst_6 [1] : vector<16x16xf32> to vector<16xf32>
    %13 = vector.shape_cast %12 : vector<16xf32> to vector<16x1xf32>
    %14 = vector.broadcast %13 : vector<16x1xf32> to vector<16x16xf32>
    %15 = arith.subf %11, %14 : vector<16x16xf32>
    %16 = math.exp %15 : vector<16x16xf32>
    %cst_7 = arith.constant dense<0.000000e+00> : vector<16xf32>
    %17 = vector.multi_reduction <add>, %16, %cst_7 [1] : vector<16x16xf32> to vector<16xf32>
    %18 = vector.shape_cast %17 : vector<16xf32> to vector<16x1xf32>
    %19 = tpu.reciprocal %18 {approx = true} : vector<16x1xf32> -> vector<16x1xf32>
    %20 = vector.broadcast %19 : vector<16x1xf32> to vector<16x16xf32>
    %21 = arith.mulf %16, %20 : vector<16x16xf32>
    %22 = arith.truncf %21 : vector<16x16xf32> to vector<16x16xbf16>
    %cst_8 = arith.constant dense<0.000000e+00> : vector<16x16xf32>
    %23 = tpu.matmul %22, %9, %cst_8 {dimension_numbers = #tpu.dot_dimension_numbers<[1], [0], [0], [1], [0, 0, 1, 1], [], []>} : vector<16x16xbf16>, vector<16x16xbf16>, vector<16x16xf32> -> vector<16x16xf32>
    %24 = vector.extract_strided_slice %7 {offsets = [0, 16], sizes = [16, 16], strides = [1, 1]} : vector<16x64xbf16> to vector<16x16xbf16>
    %cst_9 = arith.constant dense<0.000000e+00> : vector<16x16xf32>
    %25 = tpu.matmul %24, %8, %cst_9 {dimension_numbers = #tpu.dot_dimension_numbers<[1], [1], [0], [0], [0, 0, 1, 0], [], []>} : vector<16x16xbf16>, vector<16x16xbf16>, vector<16x16xf32> -> vector<16x16xf32>
    %cst_10 = arith.constant dense<0xFF800000> : vector<16xf32>
    %26 = vector.multi_reduction <maximumf>, %25, %cst_10 [1] : vector<16x16xf32> to vector<16xf32>
    %27 = vector.shape_cast %26 : vector<16xf32> to vector<16x1xf32>
    %28 = vector.broadcast %27 : vector<16x1xf32> to vector<16x16xf32>
    %29 = arith.subf %25, %28 : vector<16x16xf32>
    %30 = math.exp %29 : vector<16x16xf32>
    %cst_11 = arith.constant dense<0.000000e+00> : vector<16xf32>
    %31 = vector.multi_reduction <add>, %30, %cst_11 [1] : vector<16x16xf32> to vector<16xf32>
    %32 = vector.shape_cast %31 : vector<16xf32> to vector<16x1xf32>
    %33 = tpu.reciprocal %32 {approx = true} : vector<16x1xf32> -> vector<16x1xf32>
    %34 = vector.broadcast %33 : vector<16x1xf32> to vector<16x16xf32>
    %35 = arith.mulf %30, %34 : vector<16x16xf32>
    %36 = arith.truncf %35 : vector<16x16xf32> to vector<16x16xbf16>
    %cst_12 = arith.constant dense<0.000000e+00> : vector<16x16xf32>
    %37 = tpu.matmul %36, %9, %cst_12 {dimension_numbers = #tpu.dot_dimension_numbers<[1], [0], [0], [1], [0, 0, 1, 1], [], []>} : vector<16x16xbf16>, vector<16x16xbf16>, vector<16x16xf32> -> vector<16x16xf32>
    %38 = vector.extract_strided_slice %7 {offsets = [0, 32], sizes = [16, 16], strides = [1, 1]} : vector<16x64xbf16> to vector<16x16xbf16>
    %cst_13 = arith.constant dense<0.000000e+00> : vector<16x16xf32>
    %39 = tpu.matmul %38, %8, %cst_13 {dimension_numbers = #tpu.dot_dimension_numbers<[1], [1], [0], [0], [0, 0, 1, 0], [], []>} : vector<16x16xbf16>, vector<16x16xbf16>, vector<16x16xf32> -> vector<16x16xf32>
    %cst_14 = arith.constant dense<0xFF800000> : vector<16xf32>
    %40 = vector.multi_reduction <maximumf>, %39, %cst_14 [1] : vector<16x16xf32> to vector<16xf32>
    %41 = vector.shape_cast %40 : vector<16xf32> to vector<16x1xf32>
    %42 = vector.broadcast %41 : vector<16x1xf32> to vector<16x16xf32>
    %43 = arith.subf %39, %42 : vector<16x16xf32>
    %44 = math.exp %43 : vector<16x16xf32>
    %cst_15 = arith.constant dense<0.000000e+00> : vector<16xf32>
    %45 = vector.multi_reduction <add>, %44, %cst_15 [1] : vector<16x16xf32> to vector<16xf32>
    %46 = vector.shape_cast %45 : vector<16xf32> to vector<16x1xf32>
    %47 = tpu.reciprocal %46 {approx = true} : vector<16x1xf32> -> vector<16x1xf32>
    %48 = vector.broadcast %47 : vector<16x1xf32> to vector<16x16xf32>
    %49 = arith.mulf %44, %48 : vector<16x16xf32>
    %50 = arith.truncf %49 : vector<16x16xf32> to vector<16x16xbf16>
    %cst_16 = arith.constant dense<0.000000e+00> : vector<16x16xf32>
    %51 = tpu.matmul %50, %9, %cst_16 {dimension_numbers = #tpu.dot_dimension_numbers<[1], [0], [0], [1], [0, 0, 1, 1], [], []>} : vector<16x16xbf16>, vector<16x16xbf16>, vector<16x16xf32> -> vector<16x16xf32>
    %52 = vector.extract_strided_slice %7 {offsets = [0, 48], sizes = [16, 16], strides = [1, 1]} : vector<16x64xbf16> to vector<16x16xbf16>
    %cst_17 = arith.constant dense<0.000000e+00> : vector<16x16xf32>
    %53 = tpu.matmul %52, %8, %cst_17 {dimension_numbers = #tpu.dot_dimension_numbers<[1], [1], [0], [0], [0, 0, 1, 0], [], []>} : vector<16x16xbf16>, vector<16x16xbf16>, vector<16x16xf32> -> vector<16x16xf32>
    %cst_18 = arith.constant dense<0xFF800000> : vector<16xf32>
    %54 = vector.multi_reduction <maximumf>, %53, %cst_18 [1] : vector<16x16xf32> to vector<16xf32>
    %55 = vector.shape_cast %54 : vector<16xf32> to vector<16x1xf32>
    %56 = vector.broadcast %55 : vector<16x1xf32> to vector<16x16xf32>
    %57 = arith.subf %53, %56 : vector<16x16xf32>
    %58 = math.exp %57 : vector<16x16xf32>
    %cst_19 = arith.constant dense<0.000000e+00> : vector<16xf32>
    %59 = vector.multi_reduction <add>, %58, %cst_19 [1] : vector<16x16xf32> to vector<16xf32>
    %60 = vector.shape_cast %59 : vector<16xf32> to vector<16x1xf32>
    %61 = tpu.reciprocal %60 {approx = true} : vector<16x1xf32> -> vector<16x1xf32>
    %62 = vector.broadcast %61 : vector<16x1xf32> to vector<16x16xf32>
    %63 = arith.mulf %58, %62 : vector<16x16xf32>
    %64 = arith.truncf %63 : vector<16x16xf32> to vector<16x16xbf16>
    %cst_20 = arith.constant dense<0.000000e+00> : vector<16x16xf32>
    %65 = tpu.matmul %64, %9, %cst_20 {dimension_numbers = #tpu.dot_dimension_numbers<[1], [0], [0], [1], [0, 0, 1, 1], [], []>} : vector<16x16xbf16>, vector<16x16xbf16>, vector<16x16xf32> -> vector<16x16xf32>
    %66 = tpu.concatenate %23, %37, %51, %65 in 1 : vector<16x16xf32>, vector<16x16xf32>, vector<16x16xf32>, vector<16x16xf32> -> vector<16x64xf32>
    %67 = arith.truncf %66 : vector<16x64xf32> to vector<16x64xbf16>
    %c0_21 = arith.constant 0 : index
    %c0_22 = arith.constant 0 : index
    %68 = vector.load %arg4[%c0_21, %c0_22] : memref<64x128xbf16, #tpu.memory_space<vmem>>, vector<64x128xbf16>
    %cst_23 = arith.constant dense<0.000000e+00> : vector<16x128xf32>
    %69 = tpu.matmul %67, %68, %cst_23 {dimension_numbers = #tpu.dot_dimension_numbers<[1], [0], [0], [1], [0, 0, 1, 1], [], []>} : vector<16x64xbf16>, vector<64x128xbf16>, vector<16x128xf32> -> vector<16x128xf32>
    %c0_24 = arith.constant 0 : index
    %c0_25 = arith.constant 0 : index
    %70 = vector.load %arg5[%c0_24, %c0_25] : memref<1x128xf32, #tpu.memory_space<vmem>>, vector<1x128xf32>
    %71 = vector.broadcast %70 : vector<1x128xf32> to vector<16x128xf32>
    %72 = arith.addf %69, %71 : vector<16x128xf32>
    %c0_26 = arith.constant 0 : index
    %c0_27 = arith.constant 0 : index
    %73 = vector.load %arg6[%c0_26, %c0_27] : memref<16x128xf32, #tpu.memory_space<vmem>>, vector<16x128xf32>
    tpu.vector_store %arg6[%c0_26, %c0_27], %72 {strides = array<i32>} : memref<16x128xf32, #tpu.memory_space<vmem>>, vector<16x128xf32>,
    return
  }
  func.func @transform_0(%arg0: i32) -> (i32, i32) {
    %c0_i32 = arith.constant 0 : i32
    %c0_i32_0 = arith.constant 0 : i32
    return %arg0, %c0_i32 : i32, i32
  }
  func.func @transform_1(%arg0: i32) -> (i32, i32) {
    %c0_i32 = arith.constant 0 : i32
    %c0_i32_0 = arith.constant 0 : i32
    %c0_i32_1 = arith.constant 0 : i32
    return %c0_i32, %c0_i32_0 : i32, i32
  }
  func.func @transform_2(%arg0: i32) -> (i32, i32) {
    %c0_i32 = arith.constant 0 : i32
    %c0_i32_0 = arith.constant 0 : i32
    %c0_i32_1 = arith.constant 0 : i32
    return %c0_i32, %c0_i32_0 : i32, i32
  }
  func.func @transform_3(%arg0: i32) -> (i32, i32) {
    %c0_i32 = arith.constant 0 : i32
    %c0_i32_0 = arith.constant 0 : i32
    %c0_i32_1 = arith.constant 0 : i32
    return %c0_i32, %c0_i32_0 : i32, i32
  }
  func.func @transform_4(%arg0: i32) -> (i32, i32) {
    %c0_i32 = arith.constant 0 : i32
    %c0_i32_0 = arith.constant 0 : i32
    %c0_i32_1 = arith.constant 0 : i32
    return %c0_i32, %c0_i32_0 : i32, i32
  }
  func.func @transform_5(%arg0: i32) -> (i32, i32) {
    %c0_i32 = arith.constant 0 : i32
    %c0_i32_0 = arith.constant 0 : i32
    return %arg0, %c0_i32 : i32, i32
  }
}

</mosaic_0001>

<llo_original>
// kernel: tpu_custom_call.1
$region0: #{tpu_custom_call.1}
  #allocation0 [shape = 'u32[]', space=smem, size = 0x4, offset = 0x4, fixed_abs, tag = 'smem constant byte address 0x4 - core index']
  #allocation1 [shape = 'u32[144,128]{1,0:T(1,128)}', space=vmem, size = 0x12000, scoped, tag = 'internal scratch']
  %s0 = inlined_call_operand.hbm [shape: bf16[32,32], index: 0, kind: input, shape index: {}]
  %s1 = inlined_call_operand.hbm [shape: bf16[32,96], index: 1, kind: input, shape index: {}]
  %s2 = inlined_call_operand.vmem [shape: f32[1,96], index: 2, kind: input, shape index: {}]
  %s3 = inlined_call_operand.hbm [shape: bf16[64,128], index: 3, kind: input, shape index: {}]
  %s4 = inlined_call_operand.vmem [shape: f32[1,128], index: 4, kind: input, shape index: {}]
  %s5 = inlined_call_operand.hbm [shape: f32[32,128], index: 5, kind: output, shape index: {}]
  %s6 = sld [smem:[#allocation0]]
  $region65: #{tpu_custom_call.1} parent=0
    _
  %s8 = ssub.s32 1, %s6
  %s9 = scalar_select 0, %s8, %s6
  $region1: #{tpu_custom_call.1} parent=0
    #allocation2 [shape = 'u8[8192]{0}', space=vmem, size = 0x2000, scoped, tag = 'input window, operand 0']
    #allocation3 [shape = 's32[2]{0}', space=sflag, size = 0x8, scoped, tag = 'scoped memory for tpu_custom_call.1']
    #allocation4 [shape = 's32[2]{0}', space=sflag, size = 0x8, scoped, tag = 'scoped memory for tpu_custom_call.1']
    #allocation5 [shape = 'u8[8192]{0}', space=vmem, size = 0x2000, scoped, tag = 'input window, operand 1, single buffered']
    #allocation6 [shape = 's32[1]{0}', space=sflag, size = 0x4, scoped, tag = 'scoped memory for tpu_custom_call.1']
    #allocation7 [shape = 'u8[16384]{0}', space=vmem, size = 0x4000, scoped, tag = 'input window, operand 3, single buffered']
    #allocation8 [shape = 'u8[16384]{0}', space=vmem, size = 0x4000, scoped, tag = 'output window, operand 0']
    %10 = vsyncpa [#allocation3], 0
    %s11 = scalar_lea.sflag [#allocation3], 1
    %12 = vsyncpa %s11, 0
    %13 = vsyncpa [#allocation6], 0
    %14 = vsyncpa [#allocation4], 0
    %s15 = scalar_lea.sflag [#allocation4], 1
    %16 = vsyncpa %s15, 0
    loop: start=0, step=1, limit=4
    $region2: #{tpu_custom_call.1} parent=1 // loop_pre_header
      _
    $region3: #{tpu_custom_call.1} parent=1 // loop_header
      %s18 = sphi 0, %s22
      %p19 = scmp.ge.s32.totalorder %s18, 4
      %s28 = sphi 0, %s30
      %s31 = sphi 0, %s28
      %s32 = sphi 0, %s31
      %s48 = sphi 0, %s32
      %s52 = sphi 0, %s52
      %s54 = sphi 0, %s52
      %s55 = sphi 0, %s54
      %s69 = sphi 0, %s55
      %s73 = sphi 0, %s73
      %s75 = sphi 0, %s73
      %s76 = sphi 0, %s75
      %s90 = sphi 0, %s76
      %s94 = sphi 0, %s94
      %s96 = sphi 0, %s94
      %s97 = sphi 0, %s96
      %s111 = sphi 0, %s97
      %s115 = sphi 0, %s115
      %s117 = sphi 0, %s115
      %s118 = sphi 0, %s117
      %s132 = sphi 0, %s118
      %s138 = sphi 0, %s140
      %s141 = sphi 0, %s138
      %s142 = sphi 0, %s141
      %s158 = sphi 0, %s142
    $region4: #{tpu_custom_call.1} parent=1 // loop_header_branch
      %21 = sbr.rel (%p19) target = $region8
    $region5: #{tpu_custom_call.1} parent=1 // loop_body
      %s23 = ssub.s32 %s18, 1
      %s24 = ssub.s32 %s18, 2
      %s25 = sadd.s32 %s18, 1
      %s26 = ssub.s32 %s18, %s25
      %p27 = scmp.eq.s32.totalorder %s26, 0
      %s29 = sadd.s32 %s28, 1
      %s30 = scalar_select %p27, %s28, %s29
      %p33 = pneg %p27
      %p34 = scmp.eq.s32.totalorder %s18, 1
      %p35 = por %p33, %p34
      %p36 = scmp.ne.s32.totalorder %s28, %s31
      %p37 = scmp.eq.s32.totalorder %s18, 0
      %p38 = por %p36, %p37
      %p39 = scmp.ne.s32.totalorder %s28, %s31
      %p40 = scmp.eq.s32.totalorder %s23, 1
      %p41 = por %p39, %p40
      %p42 = scmp.ne.s32.totalorder %s31, %s32
      %p43 = scmp.eq.s32.totalorder %s23, 0
      %p44 = por %p42, %p43
      %p45 = scmp.ne.s32.totalorder %s31, %s32
      %p46 = scmp.eq.s32.totalorder %s24, 1
      %p47 = por %p45, %p46
      %p49 = scmp.ne.s32.totalorder %s32, %s48
      %p50 = scmp.eq.s32.totalorder %s24, 0
      %p51 = por %p49, %p50
      %s53 = sadd.s32 %s52, 1
      %p56 = scmp.eq.s32.totalorder %s18, 1
      %p57 = scmp.ne.s32.totalorder %s52, %s54
      %p58 = scmp.eq.s32.totalorder %s18, 0
      %p59 = por %p57, %p58
      %p60 = scmp.ne.s32.totalorder %s52, %s54
      %p61 = scmp.eq.s32.totalorder %s23, 1
      %p62 = por %p60, %p61
      %p63 = scmp.ne.s32.totalorder %s54, %s55
      %p64 = scmp.eq.s32.totalorder %s23, 0
      %p65 = por %p63, %p64
      %p66 = scmp.ne.s32.totalorder %s54, %s55
      %p67 = scmp.eq.s32.totalorder %s24, 1
      %p68 = por %p66, %p67
      %p70 = scmp.ne.s32.totalorder %s55, %s69
      %p71 = scmp.eq.s32.totalorder %s24, 0
      %p72 = por %p70, %p71
      %s74 = sadd.s32 %s73, 1
      %p77 = scmp.eq.s32.totalorder %s18, 1
      %p78 = scmp.ne.s32.totalorder %s73, %s75
      %p79 = scmp.eq.s32.totalorder %s18, 0
      %p80 = por %p78, %p79
      %p81 = scmp.ne.s32.totalorder %s73, %s75
      %p82 = scmp.eq.s32.totalorder %s23, 1
      %p83 = por %p81, %p82
      %p84 = scmp.ne.s32.totalorder %s75, %s76
      %p85 = scmp.eq.s32.totalorder %s23, 0
      %p86 = por %p84, %p85
      %p87 = scmp.ne.s32.totalorder %s75, %s76
      %p88 = scmp.eq.s32.totalorder %s24, 1
      %p89 = por %p87, %p88
      %p91 = scmp.ne.s32.totalorder %s76, %s90
      %p92 = scmp.eq.s32.totalorder %s24, 0
      %p93 = por %p91, %p92
      %s95 = sadd.s32 %s94, 1
      %p98 = scmp.eq.s32.totalorder %s18, 1
      %p99 = scmp.ne.s32.totalorder %s94, %s96
      %p100 = scmp.eq.s32.totalorder %s18, 0
      %p101 = por %p99, %p100
      %p102 = scmp.ne.s32.totalorder %s94, %s96
      %p103 = scmp.eq.s32.totalorder %s23, 1
      %p104 = por %p102, %p103
      %p105 = scmp.ne.s32.totalorder %s96, %s97
      %p106 = scmp.eq.s32.totalorder %s23, 0
      %p107 = por %p105, %p106
      %p108 = scmp.ne.s32.totalorder %s96, %s97
      %p109 = scmp.eq.s32.totalorder %s24, 1
      %p110 = por %p108, %p109
      %p112 = scmp.ne.s32.totalorder %s97, %s111
      %p113 = scmp.eq.s32.totalorder %s24, 0
      %p114 = por %p112, %p113
      %s116 = sadd.s32 %s115, 1
      %p119 = scmp.eq.s32.totalorder %s18, 1
      %p120 = scmp.ne.s32.totalorder %s115, %s117
      %p121 = scmp.eq.s32.totalorder %s18, 0
      %p122 = por %p120, %p121
      %p123 = scmp.ne.s32.totalorder %s115, %s117
      %p124 = scmp.eq.s32.totalorder %s23, 1
      %p125 = por %p123, %p124
      %p126 = scmp.ne.s32.totalorder %s117, %s118
      %p127 = scmp.eq.s32.totalorder %s23, 0
      %p128 = por %p126, %p127
      %p129 = scmp.ne.s32.totalorder %s117, %s118
      %p130 = scmp.eq.s32.totalorder %s24, 1
      %p131 = por %p129, %p130
      %p133 = scmp.ne.s32.totalorder %s118, %s132
      %p134 = scmp.eq.s32.totalorder %s24, 0
      %p135 = por %p133, %p134
      %s136 = ssub.s32 %s18, %s25
      %p137 = scmp.eq.s32.totalorder %s136, 0
      %s139 = sadd.s32 %s138, 1
      %s140 = scalar_select %p137, %s138, %s139
      %p143 = pneg %p137
      %p144 = scmp.eq.s32.totalorder %s18, 1
      %p145 = por %p143, %p144
      %p146 = scmp.ne.s32.totalorder %s138, %s141
      %p147 = scmp.eq.s32.totalorder %s18, 0
      %p148 = por %p146, %p147
      %p149 = scmp.ne.s32.totalorder %s138, %s141
      %p150 = scmp.eq.s32.totalorder %s23, 1
      %p151 = por %p149, %p150
      %p152 = scmp.ne.s32.totalorder %s141, %s142
      %p153 = scmp.eq.s32.totalorder %s23, 0
      %p154 = por %p152, %p153
      %p155 = scmp.ne.s32.totalorder %s141, %s142
      %p156 = scmp.eq.s32.totalorder %s24, 1
      %p157 = por %p155, %p156
      %p159 = scmp.ne.s32.totalorder %s142, %s158
      %p160 = scmp.eq.s32.totalorder %s24, 0
      %p161 = por %p159, %p160
      %p162 = scmp.le.s32.totalorder 1, %s18
      %p163 = scmp.lt.s32.totalorder %s18, 3
      %p164 = pnand %p162, %p163
      %p165 = pneg %p164
      // Predicated region
      $region9: #{tpu_custom_call.1} parent=5 // pred_check
        _
      $region10: #{tpu_custom_call.1} parent=5 // pred_check_branch
        %167 = sbr.rel (%p164) target = $region12
      $region11: #{tpu_custom_call.1} parent=5 // pred_region
        %s168 = ssub.s32 %s18, 1
        // Predicated region
        $region13: #{tpu_custom_call.1} parent=11 // pred_check
          %p169 = pneg %p65
        $region14: #{tpu_custom_call.1} parent=11 // pred_check_branch
          %171 = sbr.rel (%p169) target = $region16
        $region15: #{tpu_custom_call.1} parent=11 // pred_region
          %s173 = ssub.s32 256, 256
          %174 = vsyncadd [#allocation6], %s173
          %s175 = sshll.u32 [#allocation5], 4
          %s176 = int_to_ptr.vmem [resolvable:$true] %s175
          %181 = dma.hbm_to_vmem [thread:$0]  %s1, 256, %s176, [#allocation6], 64, 64, 4
        $region16: #{tpu_custom_call.1} parent=11 // pred_fallthru
          _
        // Predicated region
        $region17: #{tpu_custom_call.1} parent=11 // pred_check
          %p182 = pneg %p86
        $region18: #{tpu_custom_call.1} parent=11 // pred_check_branch
          %184 = sbr.rel (%p182) target = $region20
        $region19: #{tpu_custom_call.1} parent=11 // pred_region
          _
        $region20: #{tpu_custom_call.1} parent=11 // pred_fallthru
          _
        // Predicated region
        $region21: #{tpu_custom_call.1} parent=11 // pred_check
          %p185 = pneg %p107
        $region22: #{tpu_custom_call.1} parent=11 // pred_check_branch
          %187 = sbr.rel (%p185) target = $region24
        $region23: #{tpu_custom_call.1} parent=11 // pred_region
          %s189 = ssub.s32 512, 512
          %190 = vsyncadd [#allocation6], %s189
          %s191 = sshll.u32 [#allocation7], 4
          %s192 = int_to_ptr.vmem [resolvable:$true] %s191
          %197 = dma.hbm_to_vmem [thread:$0]  %s3, 512, %s192, [#allocation6], 64, 64, 4
        $region24: #{tpu_custom_call.1} parent=11 // pred_fallthru
          _
        // Predicated region
        $region25: #{tpu_custom_call.1} parent=11 // pred_check
          %p198 = pneg %p128
        $region26: #{tpu_custom_call.1} parent=11 // pred_check_branch
          %200 = sbr.rel (%p198) target = $region28
        $region27: #{tpu_custom_call.1} parent=11 // pred_region
          _
        $region28: #{tpu_custom_call.1} parent=11 // pred_fallthru
          _
      $region12: #{tpu_custom_call.1} parent=5 // pred_fallthru
        _
      %p201 = scmp.lt.s32.totalorder %s18, 2
      // Predicated region
      $region29: #{tpu_custom_call.1} parent=5 // pred_check
        %p202 = pneg %p201
      $region30: #{tpu_custom_call.1} parent=5 // pred_check_branch
        %204 = sbr.rel (%p202) target = $region32
      $region31: #{tpu_custom_call.1} parent=5 // pred_region
        // Predicated region
        $region33: #{tpu_custom_call.1} parent=31 // pred_check
          %p205 = pneg %p38
        $region34: #{tpu_custom_call.1} parent=31 // pred_check_branch
          %207 = sbr.rel (%p205) target = $region36
        $region35: #{tpu_custom_call.1} parent=31 // pred_region
          %s208 = sand.u32 %s28, 1
          %s209 = scalar_lea.sflag [#allocation3], %s208
          %s210 = sand.u32 %s28, 1
          %s211 = smul.addr %s210, 8
          %s212 = scalar_lea.vmem [#allocation2], %s211
          %s213 = smul.u32 2, %s18
          %s215 = ssub.s32 128, 128
          %216 = vsyncadd %s209, %s215
          %s217 = smul.addr %s213, 64
          %s218 = scalar_lea.hbm %s0, %s217
          %s219 = sshll.u32 %s212, 4
          %s220 = int_to_ptr.vmem [resolvable:$true] %s219
          %225 = dma.hbm_to_vmem [thread:$0]  %s218, 128, %s220, %s209, 64, 64, 4
        $region36: #{tpu_custom_call.1} parent=31 // pred_fallthru
          _
      $region32: #{tpu_custom_call.1} parent=5 // pred_fallthru
        _
      %p226 = scmp.le.s32.totalorder 1, %s18
      %p227 = scmp.lt.s32.totalorder %s18, 3
      %p228 = pnand %p226, %p227
      %p229 = pneg %p228
      // Predicated region
      $region37: #{tpu_custom_call.1} parent=5 // pred_check
        _
      $region38: #{tpu_custom_call.1} parent=5 // pred_check_branch
        %231 = sbr.rel (%p228) target = $region40
      $region39: #{tpu_custom_call.1} parent=5 // pred_region
        %s232 = ssub.s32 %s18, 1
        %s233 = sand.u32 %s31, 1
        %s234 = scalar_lea.sflag [#allocation3], %s233
        %s235 = sand.u32 %s31, 1
        %s236 = smul.addr %s235, 8
        %s237 = scalar_lea.vmem [#allocation2], %s236
        // Predicated region
        $region41: #{tpu_custom_call.1} parent=39 // pred_check
          %p238 = pneg %p44
        $region42: #{tpu_custom_call.1} parent=39 // pred_check_branch
          %240 = sbr.rel (%p238) target = $region44
        $region43: #{tpu_custom_call.1} parent=39 // pred_region
          %241 = dma.done %s234, 128
        $region44: #{tpu_custom_call.1} parent=39 // pred_fallthru
          _
        // Predicated region
        $region45: #{tpu_custom_call.1} parent=39 // pred_check
          %p242 = pneg %p65
        $region46: #{tpu_custom_call.1} parent=39 // pred_check_branch
          %244 = sbr.rel (%p242) target = $region48
        $region47: #{tpu_custom_call.1} parent=39 // pred_region
          %245 = dma.done [#allocation6], 256
        $region48: #{tpu_custom_call.1} parent=39 // pred_fallthru
          _
        // Predicated region
        $region49: #{tpu_custom_call.1} parent=39 // pred_check
          %p246 = pneg %p107
        $region50: #{tpu_custom_call.1} parent=39 // pred_check_branch
          %248 = sbr.rel (%p246) target = $region52
        $region51: #{tpu_custom_call.1} parent=39 // pred_region
          %249 = dma.done [#allocation6], 512
        $region52: #{tpu_custom_call.1} parent=39 // pred_fallthru
          _
        %s250 = sand.u32 %s31, 1
        %s251 = scalar_lea.sflag [#allocation3], %s250
        %s252 = sand.u32 %s31, 1
        %s253 = smul.addr %s252, 8
        %s254 = scalar_lea.vmem [#allocation2], %s253
        %p255 = pneg %p44
        %p256 = pneg %p41
        %p257 = pneg %p65
        %p258 = pneg %p62
        %p259 = pneg %p86
        %p260 = pneg %p83
        %p261 = pneg %p107
        %p262 = pneg %p104
        %p263 = pneg %p128
        %p264 = pneg %p125
        %p265 = pneg %p154
        %p266 = pneg %p151
        %s267 = sand.u32 %s141, 1
        %s268 = scalar_lea.sflag [#allocation4], %s267
        %s269 = sand.u32 %s141, 1
        %s270 = smul.addr %s269, 16
        %s271 = scalar_lea.vmem [#allocation8], %s270
        %s272 = smul.u32 2, %s23
        %s273 = smul.u32 2, %s23
        %v275 = vld [vmem:[%s237] sm:$0xf]
        %v276 = vld [vmem:[%s237 + $0x4] sm:$0xf]
        %v277 = vld [vmem:[#allocation5] sm:$0xf]
        %v278 = vld [vmem:[#allocation5 + $0x4] sm:$0xf]
        %v279 = vld [vmem:[#allocation5 + $0x8] sm:$0xf]
        %v280 = vld [vmem:[#allocation5 + $0xc] sm:$0xf]
        %v281 = vld [vmem:[%s2] sm:$0x1]
        %v283 = vlaneseq
        %v284 = vshrl.u32 %v283, 7
        %v285 = vsub.s32 0, %v284
        %v286 = vrot.slane %v281, %v285
        %v290 = vunpack.c.l.b16 %v275
        %v291 = vunpack.c.l.b16 %v276
        %v292 = vpack.c.b16 %v291, %v290
        %v297 = vunpack.c.l.b16 %v277
        %v298 = vunpack.c.l.b16 %v278
        %v299 = vunpack.c.l.b16 %v279
        %v300 = vunpack.c.l.b16 %v280
        %v301 = vpack.c.b16 %v298, %v297
        %v302 = vpack.c.b16 %v300, %v299
        %vm305 = vcmask 261120
        %v307 = vsel %vm305, %v292, 0
        %309 = vmatprep.subr.bf16.mxu0 0
        %310 = vmatpush1.bf16.msra.mxu0 0
        %311 = vmatprep.subr.bf16.mxu0 0
        %312 = vmatpush1.bf16.msra.mxu0 0
        %313 = vmatprep.subr.bf16.mxu0 0
        %314 = vmatpush1.bf16.msra.mxu0 0
        %315 = vmatprep.subr.bf16.mxu0 0
        %316 = vmatpush1.bf16.msra.mxu0 0
        %317 = vmatprep.subr.bf16.mxu0 0
        %318 = vmatpush1.bf16.msra.mxu0 0
        %319 = vmatprep.subr.bf16.mxu0 0
        %320 = vmatpush1.bf16.msra.mxu0 0
        %321 = vmatprep.subr.bf16.mxu0 0
        %322 = vmatpush1.bf16.msra.mxu0 %v302
        %323 = vmatprep.subr.bf16.mxu0 0
        %324 = vmatpush1.bf16.msra.mxu0 %v301
        %325 = vmatprep.subr.bf16.mxu0 0
        %326 = vmatpush2.bf16.msra.mxu0 0
        %327 = vmatprep.subr.bf16.mxu0 0
        %328 = vmatpush2.bf16.msra.mxu0 0
        %329 = vmatprep.subr.bf16.mxu0 0
        %330 = vmatpush2.bf16.msra.mxu0 0
        %331 = vmatprep.subr.bf16.mxu0 0
        %332 = vmatpush2.bf16.msra.mxu0 0
        %333 = vmatprep.subr.bf16.mxu0 0
        %334 = vmatpush2.bf16.msra.mxu0 0
        %335 = vmatprep.subr.bf16.mxu0 0
        %336 = vmatpush2.bf16.msra.mxu0 0
        %337 = vmatprep.subr.bf16.mxu0 0
        %338 = vmatpush2.bf16.msra.mxu0 0
        %339 = vmatprep.subr.bf16.mxu0 0
        %340 = vmatpush2.bf16.msra.mxu0 0
        %341 = vmatprep.mubr.bf16.mxu0 0
        %342 = vmatmul.mubr.bf16.gmra.mxu0 %v307
        %v343 = vpop.f32.mrf.mxu0
        %v344 = vadd.f32 %v286, %v343
        %v345 = vpop.f32.mrf.mxu0
        %v346 = vpop.f32.mrf.mxu0
        %v347 = vadd.f32 %v286, %v346
        %v348 = vpop.f32.mrf.mxu0
        %349 = vdwg.mxu0
        %v350 = vpack.c.bf16 %v347, %v344
        %352 = vrot.lane.b32.xlu0 %v350, 64
        %v353 = vpop.permute.xlu0 %352
        %vm354 = vcmask 130048
        %v356 = vsel %vm354, %v350, 0
        %v359 = vsel %vm354, %v353, 0
        %361 = vmatprep.subr.bf16.mxu0 0
        %362 = vmatpush1.bf16.xpose.msra.mxu0 0
        %363 = vmatprep.subr.bf16.mxu0 0
        %364 = vmatpush1.bf16.xpose.msra.mxu0 0
        %365 = vmatprep.subr.bf16.mxu0 0
        %366 = vmatpush1.bf16.xpose.msra.mxu0 0
        %367 = vmatprep.subr.bf16.mxu0 0
        %368 = vmatpush1.bf16.xpose.msra.mxu0 0
        %369 = vmatprep.subr.bf16.mxu0 0
        %370 = vmatpush1.bf16.xpose.msra.mxu0 0
        %371 = vmatprep.subr.bf16.mxu0 0
        %372 = vmatpush1.bf16.xpose.msra.mxu0 0
        %373 = vmatprep.subr.bf16.mxu0 0
        %374 = vmatpush1.bf16.xpose.msra.mxu0 0
        %375 = vmatprep.subr.bf16.mxu0 0
        %376 = vmatpush1.bf16.xpose.msra.mxu0 %v359
        %377 = vmatprep.subr.bf16.mxu0 0
        %378 = vmatpush2.bf16.xpose.msra.mxu0 0
        %379 = vmatprep.subr.bf16.mxu0 0
        %380 = vmatpush2.bf16.xpose.msra.mxu0 0
        %381 = vmatprep.subr.bf16.mxu0 0
        %382 = vmatpush2.bf16.xpose.msra.mxu0 0
        %383 = vmatprep.subr.bf16.mxu0 0
        %384 = vmatpush2.bf16.xpose.msra.mxu0 0
        %385 = vmatprep.subr.bf16.mxu0 0
        %386 = vmatpush2.bf16.xpose.msra.mxu0 0
        %387 = vmatprep.subr.bf16.mxu0 0
        %388 = vmatpush2.bf16.xpose.msra.mxu0 0
        %389 = vmatprep.subr.bf16.mxu0 0
        %390 = vmatpush2.bf16.xpose.msra.mxu0 0
        %391 = vmatprep.subr.bf16.mxu0 0
        %392 = vmatpush2.bf16.xpose.msra.mxu0 0
        %393 = vmatprep.mubr.bf16.mxu0 0
        %394 = vmatmul.mubr.bf16.gmra.mxu0 %v356
        %v395 = vpop.f32.mrf.mxu0
        %v396 = vadd.f32 0.0, %v395
        %v397 = vpop.f32.mrf.mxu0
        %v398 = vpop.f32.mrf.mxu0
        %v399 = vadd.f32 0.0, %v398
        %v400 = vpop.f32.mrf.mxu0
        %401 = vdwg.mxu0
        %v402 = vsel %vm354, %v396, -inf
        %403 = vmax.xlane.f32.xlu0 %v402
        %v404 = vpop.xlane.xlu0 %403
        %v405 = vsel %vm354, %v399, -inf
        %406 = vmax.xlane.f32.xlu0 %v405
        %v407 = vpop.xlane.xlu0 %406
        %v408 = vsub.f32 %v396, %v404
        %v409 = vsub.f32 %v399, %v407
        %v410 = vmul.f32 %v408, 1.442695
        %v411 = vpow.pop %v410
        %v412 = vmul.f32 %v409, 1.442695
        %v413 = vpow.pop %v412
        %v414 = vsel %vm354, %v411, 0.0
        %415 = vadd.xlane.f32.xlu0 %v414
        %v416 = vpop.xlane.xlu0 %415
        %v417 = vsel %vm354, %v413, 0.0
        %418 = vadd.xlane.f32.xlu0 %v417
        %v419 = vpop.xlane.xlu0 %418
        %v420 = vrcp.pop %v416
        %v421 = vrcp.pop %v419
        %v422 = vmul.f32 %v411, %v420
        %v423 = vmul.f32 %v413, %v421
        %v424 = vpack.c.bf16 %v423, %v422
        %425 = vrot.lane.b32.xlu0 %v350, 48
        %v426 = vpop.permute.xlu0 %425
        %v429 = vsel %vm354, %v424, 0
        %431 = vmatprep.subr.bf16.mxu0 0
        %432 = vmatpush1.bf16.msra.mxu0 0
        %433 = vmatprep.subr.bf16.mxu0 0
        %434 = vmatpush1.bf16.msra.mxu0 0
        %435 = vmatprep.subr.bf16.mxu0 0
        %436 = vmatpush1.bf16.msra.mxu0 0
        %437 = vmatprep.subr.bf16.mxu0 0
        %438 = vmatpush1.bf16.msra.mxu0 0
        %439 = vmatprep.subr.bf16.mxu0 0
        %440 = vmatpush1.bf16.msra.mxu0 0
        %441 = vmatprep.subr.bf16.mxu0 0
        %442 = vmatpush1.bf16.msra.mxu0 0
        %443 = vmatprep.subr.bf16.mxu0 0
        %444 = vmatpush1.bf16.msra.mxu0 0
        %445 = vmatprep.subr.bf16.mxu0 0
        %446 = vmatpush1.bf16.msra.mxu0 %v426
        %447 = vmatprep.subr.bf16.mxu0 0
        %448 = vmatpush2.bf16.msra.mxu0 0
        %449 = vmatprep.subr.bf16.mxu0 0
        %450 = vmatpush2.bf16.msra.mxu0 0
        %451 = vmatprep.subr.bf16.mxu0 0
        %452 = vmatpush2.bf16.msra.mxu0 0
        %453 = vmatprep.subr.bf16.mxu0 0
        %454 = vmatpush2.bf16.msra.mxu0 0
        %455 = vmatprep.subr.bf16.mxu0 0
        %456 = vmatpush2.bf16.msra.mxu0 0
        %457 = vmatprep.subr.bf16.mxu0 0
        %458 = vmatpush2.bf16.msra.mxu0 0
        %459 = vmatprep.subr.bf16.mxu0 0
        %460 = vmatpush2.bf16.msra.mxu0 0
        %461 = vmatprep.subr.bf16.mxu0 0
        %462 = vmatpush2.bf16.msra.mxu0 0
        %463 = vmatprep.mubr.bf16.mxu0 0
        %464 = vmatmul.mubr.bf16.gmra.mxu0 %v429
        %v465 = vpop.f32.mrf.mxu0
        %v466 = vadd.f32 0.0, %v465
        %v467 = vpop.f32.mrf.mxu0
        %v468 = vpop.f32.mrf.mxu0
        %v469 = vadd.f32 0.0, %v468
        %v470 = vpop.f32.mrf.mxu0
        %471 = vdwg.mxu0
        %472 = vrot.lane.b32.xlu0 %v350, 112
        %v473 = vpop.permute.xlu0 %472
        %v475 = vsel %vm354, %v473, 0
        %477 = vmatprep.subr.bf16.mxu0 0
        %478 = vmatpush1.bf16.xpose.msra.mxu0 0
        %479 = vmatprep.subr.bf16.mxu0 0
        %480 = vmatpush1.bf16.xpose.msra.mxu0 0
        %481 = vmatprep.subr.bf16.mxu0 0
        %482 = vmatpush1.bf16.xpose.msra.mxu0 0
        %483 = vmatprep.subr.bf16.mxu0 0
        %484 = vmatpush1.bf16.xpose.msra.mxu0 0
        %485 = vmatprep.subr.bf16.mxu0 0
        %486 = vmatpush1.bf16.xpose.msra.mxu0 0
        %487 = vmatprep.subr.bf16.mxu0 0
        %488 = vmatpush1.bf16.xpose.msra.mxu0 0
        %489 = vmatprep.subr.bf16.mxu0 0
        %490 = vmatpush1.bf16.xpose.msra.mxu0 0
        %491 = vmatprep.subr.bf16.mxu0 0
        %492 = vmatpush1.bf16.xpose.msra.mxu0 %v359
        %493 = vmatprep.subr.bf16.mxu0 0
        %494 = vmatpush2.bf16.xpose.msra.mxu0 0
        %495 = vmatprep.subr.bf16.mxu0 0
        %496 = vmatpush2.bf16.xpose.msra.mxu0 0
        %497 = vmatprep.subr.bf16.mxu0 0
        %498 = vmatpush2.bf16.xpose.msra.mxu0 0
        %499 = vmatprep.subr.bf16.mxu0 0
        %500 = vmatpush2.bf16.xpose.msra.mxu0 0
        %501 = vmatprep.subr.bf16.mxu0 0
        %502 = vmatpush2.bf16.xpose.msra.mxu0 0
        %503 = vmatprep.subr.bf16.mxu0 0
        %504 = vmatpush2.bf16.xpose.msra.mxu0 0
        %505 = vmatprep.subr.bf16.mxu0 0
        %506 = vmatpush2.bf16.xpose.msra.mxu0 0
        %507 = vmatprep.subr.bf16.mxu0 0
        %508 = vmatpush2.bf16.xpose.msra.mxu0 0
        %509 = vmatprep.mubr.bf16.mxu0 0
        %510 = vmatmul.mubr.bf16.gmra.mxu0 %v475
        %v511 = vpop.f32.mrf.mxu0
        %v512 = vadd.f32 0.0, %v511
        %v513 = vpop.f32.mrf.mxu0
        %v514 = vpop.f32.mrf.mxu0
        %v515 = vadd.f32 0.0, %v514
        %v516 = vpop.f32.mrf.mxu0
        %517 = vdwg.mxu0
        %v518 = vsel %vm354, %v512, -inf
        %519 = vmax.xlane.f32.xlu0 %v518
        %v520 = vpop.xlane.xlu0 %519
        %v521 = vsel %vm354, %v515, -inf
        %522 = vmax.xlane.f32.xlu0 %v521
        %v523 = vpop.xlane.xlu0 %522
        %v524 = vsub.f32 %v512, %v520
        %v525 = vsub.f32 %v515, %v523
        %v526 = vmul.f32 %v524, 1.442695
        %v527 = vpow.pop %v526
        %v528 = vmul.f32 %v525, 1.442695
        %v529 = vpow.pop %v528
        %v530 = vsel %vm354, %v527, 0.0
        %531 = vadd.xlane.f32.xlu0 %v530
        %v532 = vpop.xlane.xlu0 %531
        %v533 = vsel %vm354, %v529, 0.0
        %534 = vadd.xlane.f32.xlu0 %v533
        %v535 = vpop.xlane.xlu0 %534
        %v536 = vrcp.pop %v532
        %v537 = vrcp.pop %v535
        %v538 = vmul.f32 %v527, %v536
        %v539 = vmul.f32 %v529, %v537
        %v540 = vpack.c.bf16 %v539, %v538
        %v542 = vsel %vm354, %v540, 0
        %544 = vmatprep.subr.bf16.mxu0 0
        %545 = vmatpush1.bf16.msra.mxu0 0
        %546 = vmatprep.subr.bf16.mxu0 0
        %547 = vmatpush1.bf16.msra.mxu0 0
        %548 = vmatprep.subr.bf16.mxu0 0
        %549 = vmatpush1.bf16.msra.mxu0 0
        %550 = vmatprep.subr.bf16.mxu0 0
        %551 = vmatpush1.bf16.msra.mxu0 0
        %552 = vmatprep.subr.bf16.mxu0 0
        %553 = vmatpush1.bf16.msra.mxu0 0
        %554 = vmatprep.subr.bf16.mxu0 0
        %555 = vmatpush1.bf16.msra.mxu0 0
        %556 = vmatprep.subr.bf16.mxu0 0
        %557 = vmatpush1.bf16.msra.mxu0 0
        %558 = vmatprep.subr.bf16.mxu0 0
        %559 = vmatpush1.bf16.msra.mxu0 %v426
        %560 = vmatprep.subr.bf16.mxu0 0
        %561 = vmatpush2.bf16.msra.mxu0 0
        %562 = vmatprep.subr.bf16.mxu0 0
        %563 = vmatpush2.bf16.msra.mxu0 0
        %564 = vmatprep.subr.bf16.mxu0 0
        %565 = vmatpush2.bf16.msra.mxu0 0
        %566 = vmatprep.subr.bf16.mxu0 0
        %567 = vmatpush2.bf16.msra.mxu0 0
        %568 = vmatprep.subr.bf16.mxu0 0
        %569 = vmatpush2.bf16.msra.mxu0 0
        %570 = vmatprep.subr.bf16.mxu0 0
        %571 = vmatpush2.bf16.msra.mxu0 0
        %572 = vmatprep.subr.bf16.mxu0 0
        %573 = vmatpush2.bf16.msra.mxu0 0
        %574 = vmatprep.subr.bf16.mxu0 0
        %575 = vmatpush2.bf16.msra.mxu0 0
        %576 = vmatprep.mubr.bf16.mxu0 0
        %577 = vmatmul.mubr.bf16.gmra.mxu0 %v542
        %v578 = vpop.f32.mrf.mxu0
        %v579 = vadd.f32 0.0, %v578
        %v580 = vpop.f32.mrf.mxu0
        %v581 = vpop.f32.mrf.mxu0
        %v582 = vadd.f32 0.0, %v581
        %v583 = vpop.f32.mrf.mxu0
        %584 = vdwg.mxu0
        %585 = vrot.lane.b32.xlu0 %v350, 96
        %v586 = vpop.permute.xlu0 %585
        %v588 = vsel %vm354, %v586, 0
        %590 = vmatprep.subr.bf16.mxu0 0
        %591 = vmatpush1.bf16.xpose.msra.mxu0 0
        %592 = vmatprep.subr.bf16.mxu0 0
        %593 = vmatpush1.bf16.xpose.msra.mxu0 0
        %594 = vmatprep.subr.bf16.mxu0 0
        %595 = vmatpush1.bf16.xpose.msra.mxu0 0
        %596 = vmatprep.subr.bf16.mxu0 0
        %597 = vmatpush1.bf16.xpose.msra.mxu0 0
        %598 = vmatprep.subr.bf16.mxu0 0
        %599 = vmatpush1.bf16.xpose.msra.mxu0 0
        %600 = vmatprep.subr.bf16.mxu0 0
        %601 = vmatpush1.bf16.xpose.msra.mxu0 0
        %602 = vmatprep.subr.bf16.mxu0 0
        %603 = vmatpush1.bf16.xpose.msra.mxu0 0
        %604 = vmatprep.subr.bf16.mxu0 0
        %605 = vmatpush1.bf16.xpose.msra.mxu0 %v359
        %606 = vmatprep.subr.bf16.mxu0 0
        %607 = vmatpush2.bf16.xpose.msra.mxu0 0
        %608 = vmatprep.subr.bf16.mxu0 0
        %609 = vmatpush2.bf16.xpose.msra.mxu0 0
        %610 = vmatprep.subr.bf16.mxu0 0
        %611 = vmatpush2.bf16.xpose.msra.mxu0 0
        %612 = vmatprep.subr.bf16.mxu0 0
        %613 = vmatpush2.bf16.xpose.msra.mxu0 0
        %614 = vmatprep.subr.bf16.mxu0 0
        %615 = vmatpush2.bf16.xpose.msra.mxu0 0
        %616 = vmatprep.subr.bf16.mxu0 0
        %617 = vmatpush2.bf16.xpose.msra.mxu0 0
        %618 = vmatprep.subr.bf16.mxu0 0
        %619 = vmatpush2.bf16.xpose.msra.mxu0 0
        %620 = vmatprep.subr.bf16.mxu0 0
        %621 = vmatpush2.bf16.xpose.msra.mxu0 0
        %622 = vmatprep.mubr.bf16.mxu0 0
        %623 = vmatmul.mubr.bf16.gmra.mxu0 %v588
        %v624 = vpop.f32.mrf.mxu0
        %v625 = vadd.f32 0.0, %v624
        %v626 = vpop.f32.mrf.mxu0
        %v627 = vpop.f32.mrf.mxu0
        %v628 = vadd.f32 0.0, %v627
        %v629 = vpop.f32.mrf.mxu0
        %630 = vdwg.mxu0
        %v631 = vsel %vm354, %v625, -inf
        %632 = vmax.xlane.f32.xlu0 %v631
        %v633 = vpop.xlane.xlu0 %632
        %v634 = vsel %vm354, %v628, -inf
        %635 = vmax.xlane.f32.xlu0 %v634
        %v636 = vpop.xlane.xlu0 %635
        %v637 = vsub.f32 %v625, %v633
        %v638 = vsub.f32 %v628, %v636
        %v639 = vmul.f32 %v637, 1.442695
        %v640 = vpow.pop %v639
        %v641 = vmul.f32 %v638, 1.442695
        %v642 = vpow.pop %v641
        %v643 = vsel %vm354, %v640, 0.0
        %644 = vadd.xlane.f32.xlu0 %v643
        %v645 = vpop.xlane.xlu0 %644
        %v646 = vsel %vm354, %v642, 0.0
        %647 = vadd.xlane.f32.xlu0 %v646
        %v648 = vpop.xlane.xlu0 %647
        %v649 = vrcp.pop %v645
        %v650 = vrcp.pop %v648
        %v651 = vmul.f32 %v640, %v649
        %v652 = vmul.f32 %v642, %v650
        %v653 = vpack.c.bf16 %v652, %v651
        %v655 = vsel %vm354, %v653, 0
        %657 = vmatprep.subr.bf16.mxu0 0
        %658 = vmatpush1.bf16.msra.mxu0 0
        %659 = vmatprep.subr.bf16.mxu0 0
        %660 = vmatpush1.bf16.msra.mxu0 0
        %661 = vmatprep.subr.bf16.mxu0 0
        %662 = vmatpush1.bf16.msra.mxu0 0
        %663 = vmatprep.subr.bf16.mxu0 0
        %664 = vmatpush1.bf16.msra.mxu0 0
        %665 = vmatprep.subr.bf16.mxu0 0
        %666 = vmatpush1.bf16.msra.mxu0 0
        %667 = vmatprep.subr.bf16.mxu0 0
        %668 = vmatpush1.bf16.msra.mxu0 0
        %669 = vmatprep.subr.bf16.mxu0 0
        %670 = vmatpush1.bf16.msra.mxu0 0
        %671 = vmatprep.subr.bf16.mxu0 0
        %672 = vmatpush1.bf16.msra.mxu0 %v426
        %673 = vmatprep.subr.bf16.mxu0 0
        %674 = vmatpush2.bf16.msra.mxu0 0
        %675 = vmatprep.subr.bf16.mxu0 0
        %676 = vmatpush2.bf16.msra.mxu0 0
        %677 = vmatprep.subr.bf16.mxu0 0
        %678 = vmatpush2.bf16.msra.mxu0 0
        %679 = vmatprep.subr.bf16.mxu0 0
        %680 = vmatpush2.bf16.msra.mxu0 0
        %681 = vmatprep.subr.bf16.mxu0 0
        %682 = vmatpush2.bf16.msra.mxu0 0
        %683 = vmatprep.subr.bf16.mxu0 0
        %684 = vmatpush2.bf16.msra.mxu0 0
        %685 = vmatprep.subr.bf16.mxu0 0
        %686 = vmatpush2.bf16.msra.mxu0 0
        %687 = vmatprep.subr.bf16.mxu0 0
        %688 = vmatpush2.bf16.msra.mxu0 0
        %689 = vmatprep.mubr.bf16.mxu0 0
        %690 = vmatmul.mubr.bf16.gmra.mxu0 %v655
        %v691 = vpop.f32.mrf.mxu0
        %v692 = vadd.f32 0.0, %v691
        %v693 = vpop.f32.mrf.mxu0
        %v694 = vpop.f32.mrf.mxu0
        %v695 = vadd.f32 0.0, %v694
        %v696 = vpop.f32.mrf.mxu0
        %697 = vdwg.mxu0
        %698 = vrot.lane.b32.xlu0 %v350, 80
        %v699 = vpop.permute.xlu0 %698
        %v701 = vsel %vm354, %v699, 0
        %703 = vmatprep.subr.bf16.mxu0 0
        %704 = vmatpush1.bf16.xpose.msra.mxu0 0
        %705 = vmatprep.subr.bf16.mxu0 0
        %706 = vmatpush1.bf16.xpose.msra.mxu0 0
        %707 = vmatprep.subr.bf16.mxu0 0
        %708 = vmatpush1.bf16.xpose.msra.mxu0 0
        %709 = vmatprep.subr.bf16.mxu0 0
        %710 = vmatpush1.bf16.xpose.msra.mxu0 0
        %711 = vmatprep.subr.bf16.mxu0 0
        %712 = vmatpush1.bf16.xpose.msra.mxu0 0
        %713 = vmatprep.subr.bf16.mxu0 0
        %714 = vmatpush1.bf16.xpose.msra.mxu0 0
        %715 = vmatprep.subr.bf16.mxu0 0
        %716 = vmatpush1.bf16.xpose.msra.mxu0 0
        %717 = vmatprep.subr.bf16.mxu0 0
        %718 = vmatpush1.bf16.xpose.msra.mxu0 %v359
        %719 = vmatprep.subr.bf16.mxu0 0
        %720 = vmatpush2.bf16.xpose.msra.mxu0 0
        %721 = vmatprep.subr.bf16.mxu0 0
        %722 = vmatpush2.bf16.xpose.msra.mxu0 0
        %723 = vmatprep.subr.bf16.mxu0 0
        %724 = vmatpush2.bf16.xpose.msra.mxu0 0
        %725 = vmatprep.subr.bf16.mxu0 0
        %726 = vmatpush2.bf16.xpose.msra.mxu0 0
        %727 = vmatprep.subr.bf16.mxu0 0
        %728 = vmatpush2.bf16.xpose.msra.mxu0 0
        %729 = vmatprep.subr.bf16.mxu0 0
        %730 = vmatpush2.bf16.xpose.msra.mxu0 0
        %731 = vmatprep.subr.bf16.mxu0 0
        %732 = vmatpush2.bf16.xpose.msra.mxu0 0
        %733 = vmatprep.subr.bf16.mxu0 0
        %734 = vmatpush2.bf16.xpose.msra.mxu0 0
        %735 = vmatprep.mubr.bf16.mxu0 0
        %736 = vmatmul.mubr.bf16.gmra.mxu0 %v701
        %v737 = vpop.f32.mrf.mxu0
        %v738 = vadd.f32 0.0, %v737
        %v739 = vpop.f32.mrf.mxu0
        %v740 = vpop.f32.mrf.mxu0
        %v741 = vadd.f32 0.0, %v740
        %v742 = vpop.f32.mrf.mxu0
        %743 = vdwg.mxu0
        %v744 = vsel %vm354, %v738, -inf
        %745 = vmax.xlane.f32.xlu0 %v744
        %v746 = vpop.xlane.xlu0 %745
        %v747 = vsel %vm354, %v741, -inf
        %748 = vmax.xlane.f32.xlu0 %v747
        %v749 = vpop.xlane.xlu0 %748
        %v750 = vsub.f32 %v738, %v746
        %v751 = vsub.f32 %v741, %v749
        %v752 = vmul.f32 %v750, 1.442695
        %v753 = vpow.pop %v752
        %v754 = vmul.f32 %v751, 1.442695
        %v755 = vpow.pop %v754
        %v756 = vsel %vm354, %v753, 0.0
        %757 = vadd.xlane.f32.xlu0 %v756
        %v758 = vpop.xlane.xlu0 %757
        %v759 = vsel %vm354, %v755, 0.0
        %760 = vadd.xlane.f32.xlu0 %v759
        %v761 = vpop.xlane.xlu0 %760
        %v762 = vrcp.pop %v758
        %v763 = vrcp.pop %v761
        %v764 = vmul.f32 %v753, %v762
        %v765 = vmul.f32 %v755, %v763
        %v766 = vpack.c.bf16 %v765, %v764
        %v768 = vsel %vm354, %v766, 0
        %770 = vmatprep.subr.bf16.mxu0 0
        %771 = vmatpush1.bf16.msra.mxu0 0
        %772 = vmatprep.subr.bf16.mxu0 0
        %773 = vmatpush1.bf16.msra.mxu0 0
        %774 = vmatprep.subr.bf16.mxu0 0
        %775 = vmatpush1.bf16.msra.mxu0 0
        %776 = vmatprep.subr.bf16.mxu0 0
        %777 = vmatpush1.bf16.msra.mxu0 0
        %778 = vmatprep.subr.bf16.mxu0 0
        %779 = vmatpush1.bf16.msra.mxu0 0
        %780 = vmatprep.subr.bf16.mxu0 0
        %781 = vmatpush1.bf16.msra.mxu0 0
        %782 = vmatprep.subr.bf16.mxu0 0
        %783 = vmatpush1.bf16.msra.mxu0 0
        %784 = vmatprep.subr.bf16.mxu0 0
        %785 = vmatpush1.bf16.msra.mxu0 %v426
        %786 = vmatprep.subr.bf16.mxu0 0
        %787 = vmatpush2.bf16.msra.mxu0 0
        %788 = vmatprep.subr.bf16.mxu0 0
        %789 = vmatpush2.bf16.msra.mxu0 0
        %790 = vmatprep.subr.bf16.mxu0 0
        %791 = vmatpush2.bf16.msra.mxu0 0
        %792 = vmatprep.subr.bf16.mxu0 0
        %793 = vmatpush2.bf16.msra.mxu0 0
        %794 = vmatprep.subr.bf16.mxu0 0
        %795 = vmatpush2.bf16.msra.mxu0 0
        %796 = vmatprep.subr.bf16.mxu0 0
        %797 = vmatpush2.bf16.msra.mxu0 0
        %798 = vmatprep.subr.bf16.mxu0 0
        %799 = vmatpush2.bf16.msra.mxu0 0
        %800 = vmatprep.subr.bf16.mxu0 0
        %801 = vmatpush2.bf16.msra.mxu0 0
        %802 = vmatprep.mubr.bf16.mxu0 0
        %803 = vmatmul.mubr.bf16.gmra.mxu0 %v768
        %v804 = vpop.f32.mrf.mxu0
        %v805 = vadd.f32 0.0, %v804
        %v806 = vpop.f32.mrf.mxu0
        %v807 = vpop.f32.mrf.mxu0
        %v808 = vadd.f32 0.0, %v807
        %v809 = vpop.f32.mrf.mxu0
        %810 = vdwg.mxu0
        %813 = vrot.lane.b32.xlu0 %v579, 16
        %v814 = vpop.permute.xlu0 %813
        %815 = vrot.lane.b32.xlu0 %v582, 16
        %v816 = vpop.permute.xlu0 %815
        %821 = vrot.lane.b32.xlu0 %v692, 32
        %v822 = vpop.permute.xlu0 %821
        %823 = vrot.lane.b32.xlu0 %v695, 32
        %v824 = vpop.permute.xlu0 %823
        %829 = vrot.lane.b32.xlu0 %v805, 48
        %v830 = vpop.permute.xlu0 %829
        %831 = vrot.lane.b32.xlu0 %v808, 48
        %v832 = vpop.permute.xlu0 %831
        %v835 = vsel %vm354, %v466, %v814
        %v836 = vsel %vm354, %v469, %v816
        %v837 = vsel %vm305, %v835, %v822
        %v838 = vsel %vm305, %v836, %v824
        %vm839 = vcmask 392192
        %v840 = vsel %vm839, %v837, %v830
        %v841 = vsel %vm839, %v838, %v832
        %v842 = vpack.c.bf16 %v841, %v840
        %v843 = vld [vmem:[#allocation7] sm:$0xf]
        %v844 = vld [vmem:[#allocation7 + $0x4] sm:$0xf]
        %v845 = vld [vmem:[#allocation7 + $0x8] sm:$0xf]
        %v846 = vld [vmem:[#allocation7 + $0xc] sm:$0xf]
        %v847 = vld [vmem:[#allocation7 + $0x10] sm:$0xf]
        %v848 = vld [vmem:[#allocation7 + $0x14] sm:$0xf]
        %v849 = vld [vmem:[#allocation7 + $0x18] sm:$0xf]
        %v850 = vld [vmem:[#allocation7 + $0x1c] sm:$0xf]
        %v851 = vld [vmem:[%s4] sm:$0x1]
        %v853 = vlaneseq
        %v854 = vshrl.u32 %v853, 7
        %v855 = vsub.s32 0, %v854
        %v856 = vrot.slane %v851, %v855
        %v866 = vunpack.c.l.b16 %v843
        %v867 = vunpack.c.l.b16 %v844
        %v868 = vunpack.c.l.b16 %v845
        %v869 = vunpack.c.l.b16 %v846
        %v870 = vunpack.c.l.b16 %v847
        %v871 = vunpack.c.l.b16 %v848
        %v872 = vunpack.c.l.b16 %v849
        %v873 = vunpack.c.l.b16 %v850
        %v874 = vpack.c.b16 %v867, %v866
        %v875 = vpack.c.b16 %v869, %v868
        %v876 = vpack.c.b16 %v871, %v870
        %v877 = vpack.c.b16 %v873, %v872
        %vm882 = vcmask 523264
        %v884 = vsel %vm882, %v842, 0
        %886 = vmatprep.subr.bf16.mxu0 0
        %887 = vmatpush1.bf16.msra.mxu0 0
        %888 = vmatprep.subr.bf16.mxu0 0
        %889 = vmatpush1.bf16.msra.mxu0 0
        %890 = vmatprep.subr.bf16.mxu0 0
        %891 = vmatpush1.bf16.msra.mxu0 0
        %892 = vmatprep.subr.bf16.mxu0 0
        %893 = vmatpush1.bf16.msra.mxu0 0
        %894 = vmatprep.subr.bf16.mxu0 0
        %895 = vmatpush1.bf16.msra.mxu0 %v877
        %896 = vmatprep.subr.bf16.mxu0 0
        %897 = vmatpush1.bf16.msra.mxu0 %v876
        %898 = vmatprep.subr.bf16.mxu0 0
        %899 = vmatpush1.bf16.msra.mxu0 %v875
        %900 = vmatprep.subr.bf16.mxu0 0
        %901 = vmatpush1.bf16.msra.mxu0 %v874
        %902 = vmatprep.subr.bf16.mxu0 0
        %903 = vmatpush2.bf16.msra.mxu0 0
        %904 = vmatprep.subr.bf16.mxu0 0
        %905 = vmatpush2.bf16.msra.mxu0 0
        %906 = vmatprep.subr.bf16.mxu0 0
        %907 = vmatpush2.bf16.msra.mxu0 0
        %908 = vmatprep.subr.bf16.mxu0 0
        %909 = vmatpush2.bf16.msra.mxu0 0
        %910 = vmatprep.subr.bf16.mxu0 0
        %911 = vmatpush2.bf16.msra.mxu0 0
        %912 = vmatprep.subr.bf16.mxu0 0
        %913 = vmatpush2.bf16.msra.mxu0 0
        %914 = vmatprep.subr.bf16.mxu0 0
        %915 = vmatpush2.bf16.msra.mxu0 0
        %916 = vmatprep.subr.bf16.mxu0 0
        %917 = vmatpush2.bf16.msra.mxu0 0
        %918 = vmatprep.mubr.bf16.mxu0 0
        %919 = vmatmul.mubr.bf16.gmra.mxu0 %v884
        %v920 = vpop.f32.mrf.mxu0
        %v921 = vadd.f32 %v856, %v920
        %v922 = vpop.f32.mrf.mxu0
        %v923 = vpop.f32.mrf.mxu0
        %v924 = vadd.f32 %v856, %v923
        %v925 = vpop.f32.mrf.mxu0
        %926 = vdwg.mxu0
        %927 = vst [vmem:[%s271] sm:$0xff] %v921
        %928 = vst [vmem:[%s271 + $0x8] sm:$0xff] %v924
        %s929 = sand.u32 %s141, 1
        %s930 = scalar_lea.sflag [#allocation4], %s929
        %s931 = sand.u32 %s141, 1
        %s932 = smul.addr %s931, 16
        %s933 = scalar_lea.vmem [#allocation8], %s932
        // Predicated region
        $region53: #{tpu_custom_call.1} parent=39 // pred_check
          %p934 = pneg %p151
        $region54: #{tpu_custom_call.1} parent=39 // pred_check_branch
          %936 = sbr.rel (%p934) target = $region56
        $region55: #{tpu_custom_call.1} parent=39 // pred_region
          %s937 = smul.u32 2, %s23
          %s939 = ssub.s32 256, 256
          %940 = vsyncadd %s930, %s939
          %s941 = smul.addr %s937, 128
          %s942 = scalar_lea.hbm %s5, %s941
          %s943 = sshll.u32 %s933, 4
          %s944 = int_to_ptr.vmem [resolvable:$true] %s943
          %949 = dma.vmem_to_hbm [thread:$0]  %s944, 256, %s942, %s930, 128, 128, 8
        $region56: #{tpu_custom_call.1} parent=39 // pred_fallthru
          _
      $region40: #{tpu_custom_call.1} parent=5 // pred_fallthru
        _
      %p950 = scmp.le.s32.totalorder 2, %s18
      // Predicated region
      $region57: #{tpu_custom_call.1} parent=5 // pred_check
        %p951 = pneg %p950
      $region58: #{tpu_custom_call.1} parent=5 // pred_check_branch
        %953 = sbr.rel (%p951) target = $region60
      $region59: #{tpu_custom_call.1} parent=5 // pred_region
        %s954 = ssub.s32 %s18, 2
        // Predicated region
        $region61: #{tpu_custom_call.1} parent=59 // pred_check
          %p955 = pneg %p157
        $region62: #{tpu_custom_call.1} parent=59 // pred_check_branch
          %957 = sbr.rel (%p955) target = $region64
        $region63: #{tpu_custom_call.1} parent=59 // pred_region
          %s958 = sand.u32 %s142, 1
          %s959 = scalar_lea.sflag [#allocation4], %s958
          %s960 = sand.u32 %s142, 1
          %s961 = smul.addr %s960, 16
          %s962 = scalar_lea.vmem [#allocation8], %s961
          %963 = dma.done %s959, 256
        $region64: #{tpu_custom_call.1} parent=59 // pred_fallthru
          _
      $region60: #{tpu_custom_call.1} parent=5 // pred_fallthru
        _
    $region6: #{tpu_custom_call.1} parent=1 // loop_footer
      %s22 = sadd.s32 1, %s18
    $region7: #{tpu_custom_call.1} parent=1 // loop_footer_branch
      %17 = sbr.rel target = $region3
    $region8: #{tpu_custom_call.1} parent=1 // loop_exit
      _
    %964 = vsyncpa [#allocation3], 1
    %s965 = scalar_lea.sflag [#allocation3], 1
    %966 = vsyncpa %s965, 1
    %967 = vsyncpa [#allocation6], 1
    %968 = vsyncpa [#allocation4], 1
    %s969 = scalar_lea.sflag [#allocation4], 1
    %970 = vsyncpa %s969, 1

</llo_original>
